<compile_context>
chip_gen: v7x
topology: tpu7x:2x2x1
jax: 0.10.0
libtpu: 0.0.40
codegen_flags: <defaults>
</compile_context>

<pallas_src>
import functools
import math

import jax
import jax.numpy as jnp
from jax.experimental import pallas as pl
from jax.experimental.pallas import tpu as pltpu


def _lstm_mlp_kernel(
    x_ref,       # (T*B, D)   input sequence, time-major, flattened
    wih0p_ref,   # (D, 8H)    layer-0 input->gates, packed into combined columns
    bias8_ref,   # (1, 8H)    combined bias (b0 in layer-0 cols, b1 in layer-1 cols)
    wcomb_ref,   # (2H, 8H)   combined recurrent block weight (rows: [h0 | h1])
    mask8_ref,   # (1, 8H)    1.0 on layer-0 columns, 0.0 on layer-1 columns
    w1_ref,      # (H, 32)    linear1 weight (transposed)
    bl1_ref,     # (1, 32)    linear1 bias
    w2_ref,      # (1, 32)    linear2 weight row (transposed)
    bl2_ref,     # (1, 1)     linear2 bias
    out_ref,     # (B, 1)     output
    *,
    T,
    B,
    H,
):
    H2, H6 = 2 * H, 6 * H

    wcomb = wcomb_ref[...]          # loop-invariant recurrent weight
    bias8 = bias8_ref[...]          # (1, 8H)

    # Hoisted layer-0 input projection for ALL timesteps: one MXU call, both
    # biases folded in, already in the combined [i0,i1,f0,f1,o0,o1,g0,g1]
    # column order.  Held as a register value (T*B, 8H) = 4 vregs.
    xgb = jnp.dot(x_ref[...], wih0p_ref[...],
                  preferred_element_type=jnp.float32) + bias8      # (T*B, 8H)

    def gate_act(gates8, c01):
        # i/f/o columns were pre-scaled by 0.5 host-side, so ONE tanh over all
        # 8H lanes yields both the sigmoid gates (0.5*tanh(0.5*s)+0.5) and the
        # tanh gates.  c01 / h01 are the concatenated [layer0 | layer1] states.
        t = jnp.tanh(gates8)
        sig = 0.5 * t[:, :H6] + 0.5            # [i0,i1 | f0,f1 | o0,o1]
        g01 = t[:, H6:]                        # [g0 | g1]
        i01 = sig[:, :H2]
        f01 = sig[:, H2:2 * H2]
        o01 = sig[:, 2 * H2:]
        c_new = f01 * c01 + i01 * g01
        h_new = o01 * jnp.tanh(c_new)
        return h_new, c_new

    # Wave 0: layer-0 step 0 only (h0(-1) = 0 -> no matmul needed).  Masking
    # the layer-1 columns to zero gates makes that half produce exactly
    # h1 = c1 = 0, i.e. the true initial state for layer 1.
    c01 = jnp.zeros((B, H2), jnp.float32)
    h01, c01 = gate_act(xgb[0:B, :] * mask8_ref[...], c01)

    # Waves 1..T-1: layer-0 step w and layer-1 step w-1 together.  The carried
    # state h01 = [h0(w-1) | h1(w-2)] is fed directly as the matmul LHS.
    for w in range(1, T):
        gates8 = (jnp.dot(h01, wcomb, preferred_element_type=jnp.float32)
                  + xgb[w * B:(w + 1) * B, :])
        h01, c01 = gate_act(gates8, c01)

    # Final wave: layer-1 step T-1 (the layer-0 half is computed and discarded;
    # it shares the same matmul/EUP pushes, so it costs nothing extra).
    gates8 = jnp.dot(h01, wcomb, preferred_element_type=jnp.float32) + bias8
    h01, _ = gate_act(gates8, c01)
    h1 = h01[:, H:H2]                          # == LSTM out[:, -1, :]

    # Head: linear1 -> leaky_relu(0.01) -> linear2.  The 32->1 projection is a
    # lane multiply-reduce, avoiding a 1-column MXU matmul on the tail.
    z = jnp.dot(h1, w1_ref[...], preferred_element_type=jnp.float32) + bl1_ref[...]
    z = jnp.where(z > 0, z, 0.01 * z)          # leaky_relu, negative_slope=0.01
    y = jnp.sum(z * w2_ref[...], axis=-1, keepdims=True) + bl2_ref[...]
    out_ref[...] = y.astype(out_ref.dtype)


def _pack_params(p):
    """Host-side weight packing for the wavefront kernel.

    Combined column order (8H wide, H per block): [i0, i1, f0, f1, o0, o1, g0, g1].
    Sigmoid-gate (i/f/o) columns are pre-scaled by 0.5 so the kernel can use a
    single tanh over all 8H lanes.
    """
    H = p["whh0"].shape[0]
    D = p["wih0"].shape[0]
    f32 = jnp.float32

    def split(w):  # PyTorch gate order [i, f, g, o] along the last axis
        return jnp.split(w, 4, axis=-1)

    i0x, f0x, g0x, o0x = split(p["wih0"])     # (D, H)
    h0i, h0f, h0g, h0o = split(p["whh0"])     # (H, H)
    b0i, b0f, b0g, b0o = split(p["b0"])       # (1, H)
    x1i, x1f, x1g, x1o = split(p["wih1"])     # (H, H)
    h1i, h1f, h1g, h1o = split(p["whh1"])     # (H, H)
    b1i, b1f, b1g, b1o = split(p["b1"])       # (1, H)

    zD = jnp.zeros((D, H), f32)
    zH = jnp.zeros((H, H), f32)
    z1 = jnp.zeros((1, H), f32)
    one1 = jnp.ones((1, H), f32)
    s = 0.5

    # Layer-0 input projection weight, placed in layer-0 columns only.
    wih0p = jnp.concatenate(
        [s * i0x, zD, s * f0x, zD, s * o0x, zD, g0x, zD], axis=-1)       # (D, 8H)
    # Combined bias: b0 (= b_ih0 + b_hh0) in layer-0 cols, b1 in layer-1 cols.
    bias8 = jnp.concatenate(
        [s * b0i, s * b1i, s * b0f, s * b1f, s * b0o, s * b1o, b0g, b1g],
        axis=-1)                                                          # (1, 8H)
    # Combined recurrent weight:
    #   rows 0:H  (multiply h0(w-1)): Whh0 -> layer-0 cols, Wih1 -> layer-1 cols
    #   rows H:2H (multiply h1(w-2)): zeros -> layer-0 cols, Whh1 -> layer-1 cols
    top = jnp.concatenate(
        [s * h0i, s * x1i, s * h0f, s * x1f, s * h0o, s * x1o, h0g, x1g], axis=-1)
    bot = jnp.concatenate(
        [zH, s * h1i, zH, s * h1f, zH, s * h1o, zH, h1g], axis=-1)
    wcomb = jnp.concatenate([top, bot], axis=0)                           # (2H, 8H)

    mask8 = jnp.concatenate([one1, z1] * 4, axis=-1)                      # (1, 8H)
    return wih0p, bias8, wcomb, mask8


def lstm_forward(x, params):
    """x: (B, T, D) float32 -> (B, 1) float32."""
    B, T, D = x.shape
    H = params["whh0"].shape[0]

    # Time-major + flattened so the kernel does one big input projection and
    # slices (B, 8H) rows per wave out of the precomputed gates.
    x_flat = jnp.transpose(x, (1, 0, 2)).reshape(T * B, D)

    wih0p, bias8, wcomb, mask8 = _pack_params(params)
    w2_row = params["w2"].T                                 # (1, 32)

    args = (x_flat, wih0p, bias8, wcomb, mask8,
            params["w1"], params["bl1"], w2_row, params["bl2"])
    vmem = pl.BlockSpec(memory_space=pltpu.MemorySpace.VMEM)
    kernel = functools.partial(_lstm_mlp_kernel, T=T, B=B, H=H)
    return pl.pallas_call(
        kernel,
        out_shape=jax.ShapeDtypeStruct((B, 1), jnp.float32),
        in_specs=[vmem] * len(args),
        out_specs=vmem,
    )(*args)


def init_params(key, input_size=8, hidden_size=32):
    """Deterministic synthetic params, PyTorch-style uniform(-1/sqrt(H), 1/sqrt(H)).

    Stored in PyTorch gate order [i, f, g, o], pre-transposed to (in, out).
    """
    H = hidden_size
    k = 1.0 / math.sqrt(H)
    keys = jax.random.split(key, 14)

    def u(kk, shape):
        return jax.random.uniform(kk, shape, jnp.float32, minval=-k, maxval=k)

    wih0 = u(keys[0], (input_size, 4 * H))
    whh0 = u(keys[1], (H, 4 * H))
    b0 = u(keys[2], (1, 4 * H)) + u(keys[3], (1, 4 * H))   # b_ih + b_hh
    wih1 = u(keys[4], (H, 4 * H))
    whh1 = u(keys[5], (H, 4 * H))
    b1 = u(keys[6], (1, 4 * H)) + u(keys[7], (1, 4 * H))
    # linear1: H -> 32, linear2: 32 -> 1 (transposed to (in, out)).
    w1 = u(keys[8], (H, 32))
    bl1 = u(keys[9], (1, 32))
    k2 = 1.0 / math.sqrt(32)
    w2 = jax.random.uniform(keys[10], (32, 1), jnp.float32, minval=-k2, maxval=k2)
    bl2 = jax.random.uniform(keys[11], (1, 1), jnp.float32, minval=-k2, maxval=k2)
    # self.w_omiga and self.fc are defined in __init__ but unused in forward (am=False).
    return dict(wih0=wih0, whh0=whh0, b0=b0, wih1=wih1, whh1=whh1, b1=b1,
                w1=w1, bl1=bl1, w2=w2, bl2=bl2)


def _reference_forward(x, p):
    """Pure-JAX reference mirroring the PyTorch forward, for validation."""
    B, T, D = x.shape
    H = p["whh0"].shape[0]

    def cell(x_t, h, c, wih, whh, b):
        gates = x_t @ wih + h @ whh + b
        i, f, g, o = jnp.split(gates, 4, axis=-1)
        i, f, o = jax.nn.sigmoid(i), jax.nn.sigmoid(f), jax.nn.sigmoid(o)
        c_new = f * c + i * jnp.tanh(g)
        return o * jnp.tanh(c_new), c_new

    h0 = c0 = h1 = c1 = jnp.zeros((B, H), jnp.float32)
    for t in range(T):
        h0, c0 = cell(x[:, t, :], h0, c0, p["wih0"], p["whh0"], p["b0"])
        h1, c1 = cell(h0, h1, c1, p["wih1"], p["whh1"], p["b1"])
    z = h1 @ p["w1"] + p["bl1"]
    z = jnp.where(z > 0, z, 0.01 * z)
    return z @ p["w2"] + p["bl2"]


if __name__ == "__main__":
    B, T, D, H = 2, 8, 8, 32
    key = jax.random.PRNGKey(0)
    k_x, k_p = jax.random.split(key)
    x = jax.random.normal(k_x, (B, T, D), dtype=jnp.float32)
    params = init_params(k_p, input_size=D, hidden_size=H)

    out = jax.block_until_ready(lstm_forward(x, params))
    ref = _reference_forward(x, params)
    assert out.shape == (B, 1), out.shape
    assert jnp.allclose(out, ref, atol=1e-4, rtol=1e-4), (out, ref)
    print("KERNEL_OK")
</pallas_src>

<mosaic_0001>
module attributes {stable_mosaic.version = 11 : i64} {
  func.func @_lstm_mlp_kernel(%arg0: memref<16x8xf32, #tpu.memory_space<vmem>>, %arg1: memref<8x256xf32, #tpu.memory_space<vmem>>, %arg2: memref<1x256xf32, #tpu.memory_space<vmem>>, %arg3: memref<64x256xf32, #tpu.memory_space<vmem>>, %arg4: memref<1x256xf32, #tpu.memory_space<vmem>>, %arg5: memref<32x32xf32, #tpu.memory_space<vmem>>, %arg6: memref<1x32xf32, #tpu.memory_space<vmem>>, %arg7: memref<1x32xf32, #tpu.memory_space<vmem>>, %arg8: memref<1x1xf32, #tpu.memory_space<vmem>>, %arg9: memref<2x1xf32, #tpu.memory_space<vmem>>) attributes {dimension_semantics = [], scalar_prefetch = 0 : i64, scratch_operands = 0 : i64, tpu.core_type = #tpu.core_type<tc>} {
    %c0 = arith.constant 0 : index
    %c0_0 = arith.constant 0 : index
    %0 = vector.load %arg3[%c0, %c0_0] : memref<64x256xf32, #tpu.memory_space<vmem>>, vector<64x256xf32>
    %c0_1 = arith.constant 0 : index
    %c0_2 = arith.constant 0 : index
    %1 = vector.load %arg2[%c0_1, %c0_2] : memref<1x256xf32, #tpu.memory_space<vmem>>, vector<1x256xf32>
    %c0_3 = arith.constant 0 : index
    %c0_4 = arith.constant 0 : index
    %2 = vector.load %arg0[%c0_3, %c0_4] : memref<16x8xf32, #tpu.memory_space<vmem>>, vector<16x8xf32>
    %c0_5 = arith.constant 0 : index
    %c0_6 = arith.constant 0 : index
    %3 = vector.load %arg1[%c0_5, %c0_6] : memref<8x256xf32, #tpu.memory_space<vmem>>, vector<8x256xf32>
    %cst = arith.constant dense<0.000000e+00> : vector<16x256xf32>
    %4 = tpu.matmul %2, %3, %cst {dimension_numbers = #tpu.dot_dimension_numbers<[1], [0], [0], [1], [0, 0, 1, 1], [], []>} : vector<16x8xf32>, vector<8x256xf32>, vector<16x256xf32> -> vector<16x256xf32>
    %5 = vector.broadcast %1 : vector<1x256xf32> to vector<16x256xf32>
    %6 = arith.addf %4, %5 : vector<16x256xf32>
    %cst_7 = arith.constant 0.000000e+00 : f32
    %7 = vector.broadcast %cst_7 : f32 to vector<2x64xf32>
    %8 = vector.extract_strided_slice %6 {offsets = [0, 0], sizes = [2, 256], strides = [1, 1]} : vector<16x256xf32> to vector<2x256xf32>
    %c0_8 = arith.constant 0 : index
    %c0_9 = arith.constant 0 : index
    %9 = vector.load %arg4[%c0_8, %c0_9] : memref<1x256xf32, #tpu.memory_space<vmem>>, vector<1x256xf32>
    %10 = vector.broadcast %9 : vector<1x256xf32> to vector<2x256xf32>
    %11 = arith.mulf %8, %10 : vector<2x256xf32>
    %12 = math.tanh %11 : vector<2x256xf32>
    %13 = vector.extract_strided_slice %12 {offsets = [0, 0], sizes = [2, 192], strides = [1, 1]} : vector<2x256xf32> to vector<2x192xf32>
    %cst_10 = arith.constant 5.000000e-01 : f32
    %14 = vector.broadcast %cst_10 : f32 to vector<2x192xf32>
    %15 = arith.mulf %14, %13 : vector<2x192xf32>
    %cst_11 = arith.constant 5.000000e-01 : f32
    %16 = vector.broadcast %cst_11 : f32 to vector<2x192xf32>
    %17 = arith.addf %15, %16 : vector<2x192xf32>
    %18 = vector.extract_strided_slice %12 {offsets = [0, 192], sizes = [2, 64], strides = [1, 1]} : vector<2x256xf32> to vector<2x64xf32>
    %19 = vector.extract_strided_slice %17 {offsets = [0, 0], sizes = [2, 64], strides = [1, 1]} : vector<2x192xf32> to vector<2x64xf32>
    %20 = vector.extract_strided_slice %17 {offsets = [0, 64], sizes = [2, 64], strides = [1, 1]} : vector<2x192xf32> to vector<2x64xf32>
    %21 = vector.extract_strided_slice %17 {offsets = [0, 128], sizes = [2, 64], strides = [1, 1]} : vector<2x192xf32> to vector<2x64xf32>
    %22 = arith.mulf %20, %7 : vector<2x64xf32>
    %23 = arith.mulf %19, %18 : vector<2x64xf32>
    %24 = arith.addf %22, %23 : vector<2x64xf32>
    %25 = math.tanh %24 : vector<2x64xf32>
    %26 = arith.mulf %21, %25 : vector<2x64xf32>
    %cst_12 = arith.constant dense<0.000000e+00> : vector<2x256xf32>
    %27 = tpu.matmul %26, %0, %cst_12 {dimension_numbers = #tpu.dot_dimension_numbers<[1], [0], [0], [1], [0, 0, 1, 1], [], []>} : vector<2x64xf32>, vector<64x256xf32>, vector<2x256xf32> -> vector<2x256xf32>
    %28 = vector.extract_strided_slice %6 {offsets = [2, 0], sizes = [2, 256], strides = [1, 1]} : vector<16x256xf32> to vector<2x256xf32>
    %29 = arith.addf %27, %28 : vector<2x256xf32>
    %30 = math.tanh %29 : vector<2x256xf32>
    %31 = vector.extract_strided_slice %30 {offsets = [0, 0], sizes = [2, 192], strides = [1, 1]} : vector<2x256xf32> to vector<2x192xf32>
    %cst_13 = arith.constant 5.000000e-01 : f32
    %32 = vector.broadcast %cst_13 : f32 to vector<2x192xf32>
    %33 = arith.mulf %32, %31 : vector<2x192xf32>
    %cst_14 = arith.constant 5.000000e-01 : f32
    %34 = vector.broadcast %cst_14 : f32 to vector<2x192xf32>
    %35 = arith.addf %33, %34 : vector<2x192xf32>
    %36 = vector.extract_strided_slice %30 {offsets = [0, 192], sizes = [2, 64], strides = [1, 1]} : vector<2x256xf32> to vector<2x64xf32>
    %37 = vector.extract_strided_slice %35 {offsets = [0, 0], sizes = [2, 64], strides = [1, 1]} : vector<2x192xf32> to vector<2x64xf32>
    %38 = vector.extract_strided_slice %35 {offsets = [0, 64], sizes = [2, 64], strides = [1, 1]} : vector<2x192xf32> to vector<2x64xf32>
    %39 = vector.extract_strided_slice %35 {offsets = [0, 128], sizes = [2, 64], strides = [1, 1]} : vector<2x192xf32> to vector<2x64xf32>
    %40 = arith.mulf %38, %24 : vector<2x64xf32>
    %41 = arith.mulf %37, %36 : vector<2x64xf32>
    %42 = arith.addf %40, %41 : vector<2x64xf32>
    %43 = math.tanh %42 : vector<2x64xf32>
    %44 = arith.mulf %39, %43 : vector<2x64xf32>
    %cst_15 = arith.constant dense<0.000000e+00> : vector<2x256xf32>
    %45 = tpu.matmul %44, %0, %cst_15 {dimension_numbers = #tpu.dot_dimension_numbers<[1], [0], [0], [1], [0, 0, 1, 1], [], []>} : vector<2x64xf32>, vector<64x256xf32>, vector<2x256xf32> -> vector<2x256xf32>
    %46 = vector.extract_strided_slice %6 {offsets = [4, 0], sizes = [2, 256], strides = [1, 1]} : vector<16x256xf32> to vector<2x256xf32>
    %47 = arith.addf %45, %46 : vector<2x256xf32>
    %48 = math.tanh %47 : vector<2x256xf32>
    %49 = vector.extract_strided_slice %48 {offsets = [0, 0], sizes = [2, 192], strides = [1, 1]} : vector<2x256xf32> to vector<2x192xf32>
    %cst_16 = arith.constant 5.000000e-01 : f32
    %50 = vector.broadcast %cst_16 : f32 to vector<2x192xf32>
    %51 = arith.mulf %50, %49 : vector<2x192xf32>
    %cst_17 = arith.constant 5.000000e-01 : f32
    %52 = vector.broadcast %cst_17 : f32 to vector<2x192xf32>
    %53 = arith.addf %51, %52 : vector<2x192xf32>
    %54 = vector.extract_strided_slice %48 {offsets = [0, 192], sizes = [2, 64], strides = [1, 1]} : vector<2x256xf32> to vector<2x64xf32>
    %55 = vector.extract_strided_slice %53 {offsets = [0, 0], sizes = [2, 64], strides = [1, 1]} : vector<2x192xf32> to vector<2x64xf32>
    %56 = vector.extract_strided_slice %53 {offsets = [0, 64], sizes = [2, 64], strides = [1, 1]} : vector<2x192xf32> to vector<2x64xf32>
    %57 = vector.extract_strided_slice %53 {offsets = [0, 128], sizes = [2, 64], strides = [1, 1]} : vector<2x192xf32> to vector<2x64xf32>
    %58 = arith.mulf %56, %42 : vector<2x64xf32>
    %59 = arith.mulf %55, %54 : vector<2x64xf32>
    %60 = arith.addf %58, %59 : vector<2x64xf32>
    %61 = math.tanh %60 : vector<2x64xf32>
    %62 = arith.mulf %57, %61 : vector<2x64xf32>
    %cst_18 = arith.constant dense<0.000000e+00> : vector<2x256xf32>
    %63 = tpu.matmul %62, %0, %cst_18 {dimension_numbers = #tpu.dot_dimension_numbers<[1], [0], [0], [1], [0, 0, 1, 1], [], []>} : vector<2x64xf32>, vector<64x256xf32>, vector<2x256xf32> -> vector<2x256xf32>
    %64 = vector.extract_strided_slice %6 {offsets = [6, 0], sizes = [2, 256], strides = [1, 1]} : vector<16x256xf32> to vector<2x256xf32>
    %65 = arith.addf %63, %64 : vector<2x256xf32>
    %66 = math.tanh %65 : vector<2x256xf32>
    %67 = vector.extract_strided_slice %66 {offsets = [0, 0], sizes = [2, 192], strides = [1, 1]} : vector<2x256xf32> to vector<2x192xf32>
    %cst_19 = arith.constant 5.000000e-01 : f32
    %68 = vector.broadcast %cst_19 : f32 to vector<2x192xf32>
    %69 = arith.mulf %68, %67 : vector<2x192xf32>
    %cst_20 = arith.constant 5.000000e-01 : f32
    %70 = vector.broadcast %cst_20 : f32 to vector<2x192xf32>
    %71 = arith.addf %69, %70 : vector<2x192xf32>
    %72 = vector.extract_strided_slice %66 {offsets = [0, 192], sizes = [2, 64], strides = [1, 1]} : vector<2x256xf32> to vector<2x64xf32>
    %73 = vector.extract_strided_slice %71 {offsets = [0, 0], sizes = [2, 64], strides = [1, 1]} : vector<2x192xf32> to vector<2x64xf32>
    %74 = vector.extract_strided_slice %71 {offsets = [0, 64], sizes = [2, 64], strides = [1, 1]} : vector<2x192xf32> to vector<2x64xf32>
    %75 = vector.extract_strided_slice %71 {offsets = [0, 128], sizes = [2, 64], strides = [1, 1]} : vector<2x192xf32> to vector<2x64xf32>
    %76 = arith.mulf %74, %60 : vector<2x64xf32>
    %77 = arith.mulf %73, %72 : vector<2x64xf32>
    %78 = arith.addf %76, %77 : vector<2x64xf32>
    %79 = math.tanh %78 : vector<2x64xf32>
    %80 = arith.mulf %75, %79 : vector<2x64xf32>
    %cst_21 = arith.constant dense<0.000000e+00> : vector<2x256xf32>
    %81 = tpu.matmul %80, %0, %cst_21 {dimension_numbers = #tpu.dot_dimension_numbers<[1], [0], [0], [1], [0, 0, 1, 1], [], []>} : vector<2x64xf32>, vector<64x256xf32>, vector<2x256xf32> -> vector<2x256xf32>
    %82 = vector.extract_strided_slice %6 {offsets = [8, 0], sizes = [2, 256], strides = [1, 1]} : vector<16x256xf32> to vector<2x256xf32>
    %83 = arith.addf %81, %82 : vector<2x256xf32>
    %84 = math.tanh %83 : vector<2x256xf32>
    %85 = vector.extract_strided_slice %84 {offsets = [0, 0], sizes = [2, 192], strides = [1, 1]} : vector<2x256xf32> to vector<2x192xf32>
    %cst_22 = arith.constant 5.000000e-01 : f32
    %86 = vector.broadcast %cst_22 : f32 to vector<2x192xf32>
    %87 = arith.mulf %86, %85 : vector<2x192xf32>
    %cst_23 = arith.constant 5.000000e-01 : f32
    %88 = vector.broadcast %cst_23 : f32 to vector<2x192xf32>
    %89 = arith.addf %87, %88 : vector<2x192xf32>
    %90 = vector.extract_strided_slice %84 {offsets = [0, 192], sizes = [2, 64], strides = [1, 1]} : vector<2x256xf32> to vector<2x64xf32>
    %91 = vector.extract_strided_slice %89 {offsets = [0, 0], sizes = [2, 64], strides = [1, 1]} : vector<2x192xf32> to vector<2x64xf32>
    %92 = vector.extract_strided_slice %89 {offsets = [0, 64], sizes = [2, 64], strides = [1, 1]} : vector<2x192xf32> to vector<2x64xf32>
    %93 = vector.extract_strided_slice %89 {offsets = [0, 128], sizes = [2, 64], strides = [1, 1]} : vector<2x192xf32> to vector<2x64xf32>
    %94 = arith.mulf %92, %78 : vector<2x64xf32>
    %95 = arith.mulf %91, %90 : vector<2x64xf32>
    %96 = arith.addf %94, %95 : vector<2x64xf32>
    %97 = math.tanh %96 : vector<2x64xf32>
    %98 = arith.mulf %93, %97 : vector<2x64xf32>
    %cst_24 = arith.constant dense<0.000000e+00> : vector<2x256xf32>
    %99 = tpu.matmul %98, %0, %cst_24 {dimension_numbers = #tpu.dot_dimension_numbers<[1], [0], [0], [1], [0, 0, 1, 1], [], []>} : vector<2x64xf32>, vector<64x256xf32>, vector<2x256xf32> -> vector<2x256xf32>
    %100 = vector.extract_strided_slice %6 {offsets = [10, 0], sizes = [2, 256], strides = [1, 1]} : vector<16x256xf32> to vector<2x256xf32>
    %101 = arith.addf %99, %100 : vector<2x256xf32>
    %102 = math.tanh %101 : vector<2x256xf32>
    %103 = vector.extract_strided_slice %102 {offsets = [0, 0], sizes = [2, 192], strides = [1, 1]} : vector<2x256xf32> to vector<2x192xf32>
    %cst_25 = arith.constant 5.000000e-01 : f32
    %104 = vector.broadcast %cst_25 : f32 to vector<2x192xf32>
    %105 = arith.mulf %104, %103 : vector<2x192xf32>
    %cst_26 = arith.constant 5.000000e-01 : f32
    %106 = vector.broadcast %cst_26 : f32 to vector<2x192xf32>
    %107 = arith.addf %105, %106 : vector<2x192xf32>
    %108 = vector.extract_strided_slice %102 {offsets = [0, 192], sizes = [2, 64], strides = [1, 1]} : vector<2x256xf32> to vector<2x64xf32>
    %109 = vector.extract_strided_slice %107 {offsets = [0, 0], sizes = [2, 64], strides = [1, 1]} : vector<2x192xf32> to vector<2x64xf32>
    %110 = vector.extract_strided_slice %107 {offsets = [0, 64], sizes = [2, 64], strides = [1, 1]} : vector<2x192xf32> to vector<2x64xf32>
    %111 = vector.extract_strided_slice %107 {offsets = [0, 128], sizes = [2, 64], strides = [1, 1]} : vector<2x192xf32> to vector<2x64xf32>
    %112 = arith.mulf %110, %96 : vector<2x64xf32>
    %113 = arith.mulf %109, %108 : vector<2x64xf32>
    %114 = arith.addf %112, %113 : vector<2x64xf32>
    %115 = math.tanh %114 : vector<2x64xf32>
    %116 = arith.mulf %111, %115 : vector<2x64xf32>
    %cst_27 = arith.constant dense<0.000000e+00> : vector<2x256xf32>
    %117 = tpu.matmul %116, %0, %cst_27 {dimension_numbers = #tpu.dot_dimension_numbers<[1], [0], [0], [1], [0, 0, 1, 1], [], []>} : vector<2x64xf32>, vector<64x256xf32>, vector<2x256xf32> -> vector<2x256xf32>
    %118 = vector.extract_strided_slice %6 {offsets = [12, 0], sizes = [2, 256], strides = [1, 1]} : vector<16x256xf32> to vector<2x256xf32>
    %119 = arith.addf %117, %118 : vector<2x256xf32>
    %120 = math.tanh %119 : vector<2x256xf32>
    %121 = vector.extract_strided_slice %120 {offsets = [0, 0], sizes = [2, 192], strides = [1, 1]} : vector<2x256xf32> to vector<2x192xf32>
    %cst_28 = arith.constant 5.000000e-01 : f32
    %122 = vector.broadcast %cst_28 : f32 to vector<2x192xf32>
    %123 = arith.mulf %122, %121 : vector<2x192xf32>
    %cst_29 = arith.constant 5.000000e-01 : f32
    %124 = vector.broadcast %cst_29 : f32 to vector<2x192xf32>
    %125 = arith.addf %123, %124 : vector<2x192xf32>
    %126 = vector.extract_strided_slice %120 {offsets = [0, 192], sizes = [2, 64], strides = [1, 1]} : vector<2x256xf32> to vector<2x64xf32>
    %127 = vector.extract_strided_slice %125 {offsets = [0, 0], sizes = [2, 64], strides = [1, 1]} : vector<2x192xf32> to vector<2x64xf32>
    %128 = vector.extract_strided_slice %125 {offsets = [0, 64], sizes = [2, 64], strides = [1, 1]} : vector<2x192xf32> to vector<2x64xf32>
    %129 = vector.extract_strided_slice %125 {offsets = [0, 128], sizes = [2, 64], strides = [1, 1]} : vector<2x192xf32> to vector<2x64xf32>
    %130 = arith.mulf %128, %114 : vector<2x64xf32>
    %131 = arith.mulf %127, %126 : vector<2x64xf32>
    %132 = arith.addf %130, %131 : vector<2x64xf32>
    %133 = math.tanh %132 : vector<2x64xf32>
    %134 = arith.mulf %129, %133 : vector<2x64xf32>
    %cst_30 = arith.constant dense<0.000000e+00> : vector<2x256xf32>
    %135 = tpu.matmul %134, %0, %cst_30 {dimension_numbers = #tpu.dot_dimension_numbers<[1], [0], [0], [1], [0, 0, 1, 1], [], []>} : vector<2x64xf32>, vector<64x256xf32>, vector<2x256xf32> -> vector<2x256xf32>
    %136 = vector.extract_strided_slice %6 {offsets = [14, 0], sizes = [2, 256], strides = [1, 1]} : vector<16x256xf32> to vector<2x256xf32>
    %137 = arith.addf %135, %136 : vector<2x256xf32>
    %138 = math.tanh %137 : vector<2x256xf32>
    %139 = vector.extract_strided_slice %138 {offsets = [0, 0], sizes = [2, 192], strides = [1, 1]} : vector<2x256xf32> to vector<2x192xf32>
    %cst_31 = arith.constant 5.000000e-01 : f32
    %140 = vector.broadcast %cst_31 : f32 to vector<2x192xf32>
    %141 = arith.mulf %140, %139 : vector<2x192xf32>
    %cst_32 = arith.constant 5.000000e-01 : f32
    %142 = vector.broadcast %cst_32 : f32 to vector<2x192xf32>
    %143 = arith.addf %141, %142 : vector<2x192xf32>
    %144 = vector.extract_strided_slice %138 {offsets = [0, 192], sizes = [2, 64], strides = [1, 1]} : vector<2x256xf32> to vector<2x64xf32>
    %145 = vector.extract_strided_slice %143 {offsets = [0, 0], sizes = [2, 64], strides = [1, 1]} : vector<2x192xf32> to vector<2x64xf32>
    %146 = vector.extract_strided_slice %143 {offsets = [0, 64], sizes = [2, 64], strides = [1, 1]} : vector<2x192xf32> to vector<2x64xf32>
    %147 = vector.extract_strided_slice %143 {offsets = [0, 128], sizes = [2, 64], strides = [1, 1]} : vector<2x192xf32> to vector<2x64xf32>
    %148 = arith.mulf %146, %132 : vector<2x64xf32>
    %149 = arith.mulf %145, %144 : vector<2x64xf32>
    %150 = arith.addf %148, %149 : vector<2x64xf32>
    %151 = math.tanh %150 : vector<2x64xf32>
    %152 = arith.mulf %147, %151 : vector<2x64xf32>
    %cst_33 = arith.constant dense<0.000000e+00> : vector<2x256xf32>
    %153 = tpu.matmul %152, %0, %cst_33 {dimension_numbers = #tpu.dot_dimension_numbers<[1], [0], [0], [1], [0, 0, 1, 1], [], []>} : vector<2x64xf32>, vector<64x256xf32>, vector<2x256xf32> -> vector<2x256xf32>
    %154 = vector.broadcast %1 : vector<1x256xf32> to vector<2x256xf32>
    %155 = arith.addf %153, %154 : vector<2x256xf32>
    %156 = math.tanh %155 : vector<2x256xf32>
    %157 = vector.extract_strided_slice %156 {offsets = [0, 0], sizes = [2, 192], strides = [1, 1]} : vector<2x256xf32> to vector<2x192xf32>
    %cst_34 = arith.constant 5.000000e-01 : f32
    %158 = vector.broadcast %cst_34 : f32 to vector<2x192xf32>
    %159 = arith.mulf %158, %157 : vector<2x192xf32>
    %cst_35 = arith.constant 5.000000e-01 : f32
    %160 = vector.broadcast %cst_35 : f32 to vector<2x192xf32>
    %161 = arith.addf %159, %160 : vector<2x192xf32>
    %162 = vector.extract_strided_slice %156 {offsets = [0, 192], sizes = [2, 64], strides = [1, 1]} : vector<2x256xf32> to vector<2x64xf32>
    %163 = vector.extract_strided_slice %161 {offsets = [0, 0], sizes = [2, 64], strides = [1, 1]} : vector<2x192xf32> to vector<2x64xf32>
    %164 = vector.extract_strided_slice %161 {offsets = [0, 64], sizes = [2, 64], strides = [1, 1]} : vector<2x192xf32> to vector<2x64xf32>
    %165 = vector.extract_strided_slice %161 {offsets = [0, 128], sizes = [2, 64], strides = [1, 1]} : vector<2x192xf32> to vector<2x64xf32>
    %166 = arith.mulf %164, %150 : vector<2x64xf32>
    %167 = arith.mulf %163, %162 : vector<2x64xf32>
    %168 = arith.addf %166, %167 : vector<2x64xf32>
    %169 = math.tanh %168 : vector<2x64xf32>
    %170 = arith.mulf %165, %169 : vector<2x64xf32>
    %171 = vector.extract_strided_slice %170 {offsets = [0, 32], sizes = [2, 32], strides = [1, 1]} : vector<2x64xf32> to vector<2x32xf32>
    %c0_36 = arith.constant 0 : index
    %c0_37 = arith.constant 0 : index
    %172 = vector.load %arg5[%c0_36, %c0_37] : memref<32x32xf32, #tpu.memory_space<vmem>>, vector<32x32xf32>
    %cst_38 = arith.constant dense<0.000000e+00> : vector<2x32xf32>
    %173 = tpu.matmul %171, %172, %cst_38 {dimension_numbers = #tpu.dot_dimension_numbers<[1], [0], [0], [1], [0, 0, 1, 1], [], []>} : vector<2x32xf32>, vector<32x32xf32>, vector<2x32xf32> -> vector<2x32xf32>
    %c0_39 = arith.constant 0 : index
    %c0_40 = arith.constant 0 : index
    %174 = vector.load %arg6[%c0_39, %c0_40] : memref<1x32xf32, #tpu.memory_space<vmem>>, vector<1x32xf32>
    %175 = vector.broadcast %174 : vector<1x32xf32> to vector<2x32xf32>
    %176 = arith.addf %173, %175 : vector<2x32xf32>
    %cst_41 = arith.constant 0.000000e+00 : f32
    %177 = vector.broadcast %cst_41 : f32 to vector<2x32xf32>
    %178 = arith.cmpf ogt, %176, %177 : vector<2x32xf32>
    %cst_42 = arith.constant 0.00999999977 : f32
    %179 = vector.broadcast %cst_42 : f32 to vector<2x32xf32>
    %180 = arith.mulf %179, %176 : vector<2x32xf32>
    %181 = arith.select %178, %176, %180 : vector<2x32xi1>, vector<2x32xf32>
    %c0_43 = arith.constant 0 : index
    %c0_44 = arith.constant 0 : index
    %182 = vector.load %arg7[%c0_43, %c0_44] : memref<1x32xf32, #tpu.memory_space<vmem>>, vector<1x32xf32>
    %183 = vector.broadcast %182 : vector<1x32xf32> to vector<2x32xf32>
    %184 = arith.mulf %181, %183 : vector<2x32xf32>
    %cst_45 = arith.constant dense<0.000000e+00> : vector<2xf32>
    %185 = vector.multi_reduction <add>, %184, %cst_45 [1] : vector<2x32xf32> to vector<2xf32>
    %186 = vector.shape_cast %185 : vector<2xf32> to vector<2x1xf32>
    %c0_46 = arith.constant 0 : index
    %c0_47 = arith.constant 0 : index
    %187 = vector.load %arg8[%c0_46, %c0_47] : memref<1x1xf32, #tpu.memory_space<vmem>>, vector<1x1xf32>
    %188 = vector.broadcast %187 : vector<1x1xf32> to vector<2x1xf32>
    %189 = arith.addf %186, %188 : vector<2x1xf32>
    %c0_48 = arith.constant 0 : index
    %c0_49 = arith.constant 0 : index
    %190 = vector.load %arg9[%c0_48, %c0_49] : memref<2x1xf32, #tpu.memory_space<vmem>>, vector<2x1xf32>
    tpu.vector_store %arg9[%c0_48, %c0_49], %189 {strides = array<i32>} : memref<2x1xf32, #tpu.memory_space<vmem>>, vector<2x1xf32>,
    return
  }
}

</mosaic_0001>

<llo_original>
// kernel: tpu_custom_call.1
$region0: #{tpu_custom_call.1}
  #allocation0 [shape = 'u32[]', space=smem, size = 0x4, offset = 0x4, fixed_abs, tag = 'smem constant byte address 0x4 - core index']
  #allocation1 [shape = 'u32[144,128]{1,0:T(1,128)}', space=vmem, size = 0x12000, scoped, tag = 'internal scratch']
  #allocation2 [shape = 'f32[1,1]{1,0:T(1,128)S(1)}', space=vmem, size = 0x200, scoped, tag = 'scoped memory for tpu_custom_call.1']
  %s0 = inlined_call_operand.vmem [shape: f32[16,8], index: 0, kind: input, shape index: {}]
  %s1 = inlined_call_operand.hbm [shape: f32[8,256], index: 1, kind: input, shape index: {}]
  %s2 = inlined_call_operand.vmem [shape: f32[1,256], index: 2, kind: input, shape index: {}]
  %s3 = inlined_call_operand.hbm [shape: f32[64,256], index: 3, kind: input, shape index: {}]
  %s4 = inlined_call_operand.vmem [shape: f32[1,256], index: 4, kind: input, shape index: {}]
  %s5 = inlined_call_operand.vmem [shape: f32[32,32], index: 5, kind: input, shape index: {}]
  %s6 = inlined_call_operand.vmem [shape: f32[1,32], index: 6, kind: input, shape index: {}]
  %s7 = inlined_call_operand.vmem [shape: f32[1,32], index: 7, kind: input, shape index: {}]
  %s8 = inlined_call_operand.<no memory space> [shape: f32[1,1], index: 8, kind: input, shape index: {}]
  %s9 = inlined_call_operand.vmem [shape: f32[2,1], index: 9, kind: output, shape index: {}]
  %s10 = sld [smem:[#allocation0]]
  $region54: #{tpu_custom_call.1} parent=0
    _
  %s12 = ssub.s32 1, %s10
  %s13 = scalar_select 0, %s12, %s10
  %v14 = vstv %s8
  %15 = vst [vmem:[#allocation2] sm:$0x1] %v14
  $region1: #{tpu_custom_call.1} parent=0
    #allocation3 [shape = 'u8[8192]{0}', space=vmem, size = 0x2000, scoped, tag = 'input window, operand 1, single buffered']
    #allocation4 [shape = 's32[1]{0}', space=sflag, size = 0x4, scoped, tag = 'scoped memory for tpu_custom_call.1']
    #allocation5 [shape = 'u8[65536]{0}', space=vmem, size = 0x10000, scoped, tag = 'input window, operand 3, single buffered']
    #allocation6 [shape = 's32[1]{0}', space=sflag, size = 0x4, scoped, tag = 'scoped memory for tpu_custom_call.1']
    %16 = vsyncpa [#allocation4], 0
    %17 = vsyncpa [#allocation6], 0
    // Predicated region
    $region2: #{tpu_custom_call.1} parent=1 // pred_check
      _
    $region3: #{tpu_custom_call.1} parent=1 // pred_check_branch
      %19 = sbr.rel (0) target = $region5
    $region4: #{tpu_custom_call.1} parent=1 // pred_region
      _
    $region5: #{tpu_custom_call.1} parent=1 // pred_fallthru
      _
    // Predicated region
    $region6: #{tpu_custom_call.1} parent=1 // pred_check
      _
    $region7: #{tpu_custom_call.1} parent=1 // pred_check_branch
      %21 = sbr.rel (0) target = $region9
    $region8: #{tpu_custom_call.1} parent=1 // pred_region
      %s23 = ssub.s32 256, 256
      %24 = vsyncadd [#allocation4], %s23
      %s26 = sshll.u32 [#allocation3], 4
      %s27 = int_to_ptr.vmem [resolvable:$true] %s26
      %29 = dma.hbm_to_vmem [thread:$0]  %s1, 256, %s27, [#allocation4]
    $region9: #{tpu_custom_call.1} parent=1 // pred_fallthru
      _
    // Predicated region
    $region10: #{tpu_custom_call.1} parent=1 // pred_check
      _
    $region11: #{tpu_custom_call.1} parent=1 // pred_check_branch
      %31 = sbr.rel (0) target = $region13
    $region12: #{tpu_custom_call.1} parent=1 // pred_region
      _
    $region13: #{tpu_custom_call.1} parent=1 // pred_fallthru
      _
    // Predicated region
    $region14: #{tpu_custom_call.1} parent=1 // pred_check
      _
    $region15: #{tpu_custom_call.1} parent=1 // pred_check_branch
      %33 = sbr.rel (0) target = $region17
    $region16: #{tpu_custom_call.1} parent=1 // pred_region
      %s35 = ssub.s32 2048, 2048
      %36 = vsyncadd [#allocation6], %s35
      %s37 = sshll.u32 [#allocation5], 4
      %s38 = int_to_ptr.vmem [resolvable:$true] %s37
      %43 = dma.hbm_to_vmem [thread:$0]  %s3, 2048, %s38, [#allocation6], 256, 256, 16
    $region17: #{tpu_custom_call.1} parent=1 // pred_fallthru
      _
    // Predicated region
    $region18: #{tpu_custom_call.1} parent=1 // pred_check
      _
    $region19: #{tpu_custom_call.1} parent=1 // pred_check_branch
      %45 = sbr.rel (0) target = $region21
    $region20: #{tpu_custom_call.1} parent=1 // pred_region
      _
    $region21: #{tpu_custom_call.1} parent=1 // pred_fallthru
      _
    // Predicated region
    $region22: #{tpu_custom_call.1} parent=1 // pred_check
      _
    $region23: #{tpu_custom_call.1} parent=1 // pred_check_branch
      %47 = sbr.rel (0) target = $region25
    $region24: #{tpu_custom_call.1} parent=1 // pred_region
      _
    $region25: #{tpu_custom_call.1} parent=1 // pred_fallthru
      _
    // Predicated region
    $region26: #{tpu_custom_call.1} parent=1 // pred_check
      _
    $region27: #{tpu_custom_call.1} parent=1 // pred_check_branch
      %49 = sbr.rel (0) target = $region29
    $region28: #{tpu_custom_call.1} parent=1 // pred_region
      _
    $region29: #{tpu_custom_call.1} parent=1 // pred_fallthru
      _
    // Predicated region
    $region30: #{tpu_custom_call.1} parent=1 // pred_check
      _
    $region31: #{tpu_custom_call.1} parent=1 // pred_check_branch
      %51 = sbr.rel (0) target = $region33
    $region32: #{tpu_custom_call.1} parent=1 // pred_region
      _
    $region33: #{tpu_custom_call.1} parent=1 // pred_fallthru
      _
    // Predicated region
    $region34: #{tpu_custom_call.1} parent=1 // pred_check
      _
    $region35: #{tpu_custom_call.1} parent=1 // pred_check_branch
      %53 = sbr.rel (0) target = $region37
    $region36: #{tpu_custom_call.1} parent=1 // pred_region
      _
    $region37: #{tpu_custom_call.1} parent=1 // pred_fallthru
      _
    // Predicated region
    $region38: #{tpu_custom_call.1} parent=1 // pred_check
      _
    $region39: #{tpu_custom_call.1} parent=1 // pred_check_branch
      %55 = sbr.rel (0) target = $region41
    $region40: #{tpu_custom_call.1} parent=1 // pred_region
      %56 = dma.done [#allocation4], 256
    $region41: #{tpu_custom_call.1} parent=1 // pred_fallthru
      _
    // Predicated region
    $region42: #{tpu_custom_call.1} parent=1 // pred_check
      _
    $region43: #{tpu_custom_call.1} parent=1 // pred_check_branch
      %58 = sbr.rel (0) target = $region45
    $region44: #{tpu_custom_call.1} parent=1 // pred_region
      %59 = dma.done [#allocation6], 2048
    $region45: #{tpu_custom_call.1} parent=1 // pred_fallthru
      _
    %v60 = vld [vmem:[#allocation5] sm:$0xff]
    %v61 = vld [vmem:[#allocation5 + $0x8] sm:$0xff]
    %v62 = vld [vmem:[#allocation5 + $0x10] sm:$0xff]
    %v63 = vld [vmem:[#allocation5 + $0x18] sm:$0xff]
    %v64 = vld [vmem:[#allocation5 + $0x20] sm:$0xff]
    %v65 = vld [vmem:[#allocation5 + $0x28] sm:$0xff]
    %v66 = vld [vmem:[#allocation5 + $0x30] sm:$0xff]
    %v67 = vld [vmem:[#allocation5 + $0x38] sm:$0xff]
    %v68 = vld [vmem:[#allocation5 + $0x40] sm:$0xff]
    %v69 = vld [vmem:[#allocation5 + $0x48] sm:$0xff]
    %v70 = vld [vmem:[#allocation5 + $0x50] sm:$0xff]
    %v71 = vld [vmem:[#allocation5 + $0x58] sm:$0xff]
    %v72 = vld [vmem:[#allocation5 + $0x60] sm:$0xff]
    %v73 = vld [vmem:[#allocation5 + $0x68] sm:$0xff]
    %v74 = vld [vmem:[#allocation5 + $0x70] sm:$0xff]
    %v75 = vld [vmem:[#allocation5 + $0x78] sm:$0xff]
    %v76 = vld [vmem:[%s2] sm:$0x3]
    %v77 = vld [vmem:[%s0] sm:$0xff]
    %v78 = vld [vmem:[%s0 + $0x8] sm:$0xff]
    %v79 = vld [vmem:[#allocation3] sm:$0xff]
    %v80 = vld [vmem:[#allocation3 + $0x8] sm:$0xff]
    %v82 = vlaneseq
    %v83 = vshrl.u32 %v82, 7
    %v84 = vsub.s32 0, %v83
    %v85 = vrot.slane %v76, %v84
    %v86 = vlaneseq
    %v87 = vshrl.u32 %v86, 7
    %v88 = vsub.s32 1, %v87
    %v89 = vrot.slane %v76, %v88
    %vm92 = vcmask 64512
    %v94 = vsel %vm92, %v77, 0
    %v97 = vsel %vm92, %v78, 0
    %99 = vmatprep.subr.mxu0 %v80
    %100 = vmatpush1.msra.mxu0 %v79
    %101 = vmatprep.subr.mxu0 0.0
    %102 = vmatpush1.msra.mxu0 0.0
    %103 = vmatprep.subr.mxu0 0.0
    %104 = vmatpush1.msra.mxu0 0.0
    %105 = vmatprep.subr.mxu0 0.0
    %106 = vmatpush1.msra.mxu0 0.0
    %107 = vmatprep.subr.mxu0 0.0
    %108 = vmatpush1.msra.mxu0 0.0
    %109 = vmatprep.subr.mxu0 0.0
    %110 = vmatpush1.msra.mxu0 0.0
    %111 = vmatprep.subr.mxu0 0.0
    %112 = vmatpush1.msra.mxu0 0.0
    %113 = vmatprep.subr.mxu0 0.0
    %114 = vmatpush1.msra.mxu0 0.0
    %115 = vmatprep.subr.mxu0 0.0
    %116 = vmatpush1.msra.mxu0 0.0
    %117 = vmatprep.subr.mxu0 0.0
    %118 = vmatpush1.msra.mxu0 0.0
    %119 = vmatprep.subr.mxu0 0.0
    %120 = vmatpush1.msra.mxu0 0.0
    %121 = vmatprep.subr.mxu0 0.0
    %122 = vmatpush1.msra.mxu0 0.0
    %123 = vmatprep.subr.mxu0 0.0
    %124 = vmatpush1.msra.mxu0 0.0
    %125 = vmatprep.subr.mxu0 0.0
    %126 = vmatpush1.msra.mxu0 0.0
    %127 = vmatprep.subr.mxu0 0.0
    %128 = vmatpush1.msra.mxu0 0.0
    %129 = vmatprep.subr.mxu0 0.0
    %130 = vmatpush1.msra.mxu0 0.0
    %131 = vmatprep.subr.mxu0 0.0
    %132 = vmatpush1.msra.mxu0 0.0
    %133 = vmatprep.subr.mxu0 0.0
    %134 = vmatpush1.msra.mxu0 0.0
    %135 = vmatprep.subr.mxu0 0.0
    %136 = vmatpush1.msra.mxu0 0.0
    %137 = vmatprep.subr.mxu0 0.0
    %138 = vmatpush1.msra.mxu0 0.0
    %139 = vmatprep.subr.mxu0 0.0
    %140 = vmatpush1.msra.mxu0 0.0
    %141 = vmatprep.subr.mxu0 0.0
    %142 = vmatpush1.msra.mxu0 0.0
    %143 = vmatprep.subr.mxu0 0.0
    %144 = vmatpush1.msra.mxu0 0.0
    %145 = vmatprep.subr.mxu0 0.0
    %146 = vmatpush1.msra.mxu0 0.0
    %147 = vmatprep.subr.mxu0 0.0
    %148 = vmatpush1.msra.mxu0 0.0
    %149 = vmatprep.subr.mxu0 0.0
    %150 = vmatpush1.msra.mxu0 0.0
    %151 = vmatprep.subr.mxu0 0.0
    %152 = vmatpush1.msra.mxu0 0.0
    %153 = vmatprep.subr.mxu0 0.0
    %154 = vmatpush1.msra.mxu0 0.0
    %155 = vmatprep.subr.mxu0 0.0
    %156 = vmatpush1.msra.mxu0 0.0
    %157 = vmatprep.subr.mxu0 0.0
    %158 = vmatpush1.msra.mxu0 0.0
    %159 = vmatprep.subr.mxu0 0.0
    %160 = vmatpush1.msra.mxu0 0.0
    %161 = vmatprep.subr.mxu0 0.0
    %162 = vmatpush1.msra.mxu0 0.0
    %163 = vmatprep.mubr.f32.mxu0 0.0
    %164 = vmatmul.mubr.f32.gmra.mrb[0].mxu0 %v94
    %v165 = vpop.f32.mrb[0].mxu0
    %v166 = vadd.f32 %v85, %v165
    %v167 = vpop.f32.mrb[0].mxu0
    %v168 = vadd.f32 %v89, %v167
    %169 = vmatprep.mubr.f32.mxu0 0.0
    %170 = vmatmul.mubr.f32.gmra.mrb[0].mxu0 %v97
    %v171 = vpop.f32.mrb[0].mxu0
    %v172 = vadd.f32 %v85, %v171
    %v173 = vpop.f32.mrb[0].mxu0
    %v174 = vadd.f32 %v89, %v173
    %175 = vdwg.mxu0
    %v176 = vld [vmem:[%s4] sm:$0x3]
    %v178 = vlaneseq
    %v179 = vshrl.u32 %v178, 7
    %v180 = vsub.s32 0, %v179
    %v181 = vrot.slane %v176, %v180
    %v182 = vlaneseq
    %v183 = vshrl.u32 %v182, 7
    %v184 = vsub.s32 1, %v183
    %v185 = vrot.slane %v176, %v184
    %v188 = vmul.f32 %v166, %v181
    %v189 = vmul.f32 %v168, %v185
    %v190 = vtanh.pop %v188
    %v191 = vtanh.pop %v189
    %v192 = vmul.f32 %v190, 0.5
    %v193 = vmul.f32 %v191, 0.5
    %v194 = vadd.f32 %v192, 0.5
    %v195 = vadd.f32 %v193, 0.5
    %v196 = vmul.f32 %v194, 0.0
    %198 = vrot.lane.b32.xlu0 %v191, 64
    %v199 = vpop.permute.xlu0 %198
    %v201 = vmul.f32 %v194, %v199
    %203 = vrot.lane.b32.xlu0 %v201, 64
    %v204 = vpop.permute.xlu0 %203
    %v206 = vadd.f32 %v196, %v204
    %v207 = vtanh.pop %v206
    %209 = vrot.lane.b32.xlu0 %v207, 64
    %v210 = vpop.permute.xlu0 %209
    %v212 = vmul.f32 %v195, %v210
    %v215 = vrot.slane %v166, 2
    %v216 = vrot.slane %v168, 2
    %vm219 = vcmask 523264
    %v221 = vsel %vm219, %v212, 0
    %223 = vmatprep.subr.mxu0 %v61
    %224 = vmatpush1.msra.mxu0 %v60
    %225 = vmatprep.subr.mxu0 %v63
    %226 = vmatpush1.msra.mxu0 %v62
    %227 = vmatprep.subr.mxu0 %v65
    %228 = vmatpush1.msra.mxu0 %v64
    %229 = vmatprep.subr.mxu0 %v67
    %230 = vmatpush1.msra.mxu0 %v66
    %231 = vmatprep.subr.mxu0 %v69
    %232 = vmatpush1.msra.mxu0 %v68
    %233 = vmatprep.subr.mxu0 %v71
    %234 = vmatpush1.msra.mxu0 %v70
    %235 = vmatprep.subr.mxu0 %v73
    %236 = vmatpush1.msra.mxu0 %v72
    %237 = vmatprep.subr.mxu0 %v75
    %238 = vmatpush1.msra.mxu0 %v74
    %239 = vmatprep.subr.mxu0 0.0
    %240 = vmatpush1.msra.mxu0 0.0
    %241 = vmatprep.subr.mxu0 0.0
    %242 = vmatpush1.msra.mxu0 0.0
    %243 = vmatprep.subr.mxu0 0.0
    %244 = vmatpush1.msra.mxu0 0.0
    %245 = vmatprep.subr.mxu0 0.0
    %246 = vmatpush1.msra.mxu0 0.0
    %247 = vmatprep.subr.mxu0 0.0
    %248 = vmatpush1.msra.mxu0 0.0
    %249 = vmatprep.subr.mxu0 0.0
    %250 = vmatpush1.msra.mxu0 0.0
    %251 = vmatprep.subr.mxu0 0.0
    %252 = vmatpush1.msra.mxu0 0.0
    %253 = vmatprep.subr.mxu0 0.0
    %254 = vmatpush1.msra.mxu0 0.0
    %255 = vmatprep.subr.mxu0 0.0
    %256 = vmatpush1.msra.mxu0 0.0
    %257 = vmatprep.subr.mxu0 0.0
    %258 = vmatpush1.msra.mxu0 0.0
    %259 = vmatprep.subr.mxu0 0.0
    %260 = vmatpush1.msra.mxu0 0.0
    %261 = vmatprep.subr.mxu0 0.0
    %262 = vmatpush1.msra.mxu0 0.0
    %263 = vmatprep.subr.mxu0 0.0
    %264 = vmatpush1.msra.mxu0 0.0
    %265 = vmatprep.subr.mxu0 0.0
    %266 = vmatpush1.msra.mxu0 0.0
    %267 = vmatprep.subr.mxu0 0.0
    %268 = vmatpush1.msra.mxu0 0.0
    %269 = vmatprep.subr.mxu0 0.0
    %270 = vmatpush1.msra.mxu0 0.0
    %271 = vmatprep.subr.mxu0 0.0
    %272 = vmatpush1.msra.mxu0 0.0
    %273 = vmatprep.subr.mxu0 0.0
    %274 = vmatpush1.msra.mxu0 0.0
    %275 = vmatprep.subr.mxu0 0.0
    %276 = vmatpush1.msra.mxu0 0.0
    %277 = vmatprep.subr.mxu0 0.0
    %278 = vmatpush1.msra.mxu0 0.0
    %279 = vmatprep.subr.mxu0 0.0
    %280 = vmatpush1.msra.mxu0 0.0
    %281 = vmatprep.subr.mxu0 0.0
    %282 = vmatpush1.msra.mxu0 0.0
    %283 = vmatprep.subr.mxu0 0.0
    %284 = vmatpush1.msra.mxu0 0.0
    %285 = vmatprep.subr.mxu0 0.0
    %286 = vmatpush1.msra.mxu0 0.0
    %287 = vmatprep.mubr.f32.mxu0 0.0
    %288 = vmatmul.mubr.f32.gmra.mrb[0].mxu0 %v221
    %v289 = vpop.f32.mrb[0].mxu0
    %v290 = vadd.f32 %v215, %v289
    %v291 = vpop.f32.mrb[0].mxu0
    %v292 = vadd.f32 %v216, %v291
    %293 = vdwg.mxu0
    %v294 = vtanh.pop %v290
    %v295 = vtanh.pop %v292
    %v296 = vmul.f32 %v294, 0.5
    %v297 = vmul.f32 %v295, 0.5
    %v298 = vadd.f32 %v296, 0.5
    %v299 = vadd.f32 %v297, 0.5
    %v300 = vmul.f32 %v298, %v206
    %302 = vrot.lane.b32.xlu0 %v295, 64
    %v303 = vpop.permute.xlu0 %302
    %v305 = vmul.f32 %v298, %v303
    %307 = vrot.lane.b32.xlu0 %v305, 64
    %v308 = vpop.permute.xlu0 %307
    %v310 = vadd.f32 %v300, %v308
    %v311 = vtanh.pop %v310
    %313 = vrot.lane.b32.xlu0 %v311, 64
    %v314 = vpop.permute.xlu0 %313
    %v316 = vmul.f32 %v299, %v314
    %v317 = vrot.slane %v166, 4
    %v318 = vrot.slane %v168, 4
    %v322 = vsel %vm219, %v316, 0
    %324 = vmatprep.subr.mxu0 %v61
    %325 = vmatpush1.msra.mxu0 %v60
    %326 = vmatprep.subr.mxu0 %v63
    %327 = vmatpush1.msra.mxu0 %v62
    %328 = vmatprep.subr.mxu0 %v65
    %329 = vmatpush1.msra.mxu0 %v64
    %330 = vmatprep.subr.mxu0 %v67
    %331 = vmatpush1.msra.mxu0 %v66
    %332 = vmatprep.subr.mxu0 %v69
    %333 = vmatpush1.msra.mxu0 %v68
    %334 = vmatprep.subr.mxu0 %v71
    %335 = vmatpush1.msra.mxu0 %v70
    %336 = vmatprep.subr.mxu0 %v73
    %337 = vmatpush1.msra.mxu0 %v72
    %338 = vmatprep.subr.mxu0 %v75
    %339 = vmatpush1.msra.mxu0 %v74
    %340 = vmatprep.subr.mxu0 0.0
    %341 = vmatpush1.msra.mxu0 0.0
    %342 = vmatprep.subr.mxu0 0.0
    %343 = vmatpush1.msra.mxu0 0.0
    %344 = vmatprep.subr.mxu0 0.0
    %345 = vmatpush1.msra.mxu0 0.0
    %346 = vmatprep.subr.mxu0 0.0
    %347 = vmatpush1.msra.mxu0 0.0
    %348 = vmatprep.subr.mxu0 0.0
    %349 = vmatpush1.msra.mxu0 0.0
    %350 = vmatprep.subr.mxu0 0.0
    %351 = vmatpush1.msra.mxu0 0.0
    %352 = vmatprep.subr.mxu0 0.0
    %353 = vmatpush1.msra.mxu0 0.0
    %354 = vmatprep.subr.mxu0 0.0
    %355 = vmatpush1.msra.mxu0 0.0
    %356 = vmatprep.subr.mxu0 0.0
    %357 = vmatpush1.msra.mxu0 0.0
    %358 = vmatprep.subr.mxu0 0.0
    %359 = vmatpush1.msra.mxu0 0.0
    %360 = vmatprep.subr.mxu0 0.0
    %361 = vmatpush1.msra.mxu0 0.0
    %362 = vmatprep.subr.mxu0 0.0
    %363 = vmatpush1.msra.mxu0 0.0
    %364 = vmatprep.subr.mxu0 0.0
    %365 = vmatpush1.msra.mxu0 0.0
    %366 = vmatprep.subr.mxu0 0.0
    %367 = vmatpush1.msra.mxu0 0.0
    %368 = vmatprep.subr.mxu0 0.0
    %369 = vmatpush1.msra.mxu0 0.0
    %370 = vmatprep.subr.mxu0 0.0
    %371 = vmatpush1.msra.mxu0 0.0
    %372 = vmatprep.subr.mxu0 0.0
    %373 = vmatpush1.msra.mxu0 0.0
    %374 = vmatprep.subr.mxu0 0.0
    %375 = vmatpush1.msra.mxu0 0.0
    %376 = vmatprep.subr.mxu0 0.0
    %377 = vmatpush1.msra.mxu0 0.0
    %378 = vmatprep.subr.mxu0 0.0
    %379 = vmatpush1.msra.mxu0 0.0
    %380 = vmatprep.subr.mxu0 0.0
    %381 = vmatpush1.msra.mxu0 0.0
    %382 = vmatprep.subr.mxu0 0.0
    %383 = vmatpush1.msra.mxu0 0.0
    %384 = vmatprep.subr.mxu0 0.0
    %385 = vmatpush1.msra.mxu0 0.0
    %386 = vmatprep.subr.mxu0 0.0
    %387 = vmatpush1.msra.mxu0 0.0
    %388 = vmatprep.mubr.f32.mxu0 0.0
    %389 = vmatmul.mubr.f32.gmra.mrb[0].mxu0 %v322
    %v390 = vpop.f32.mrb[0].mxu0
    %v391 = vadd.f32 %v317, %v390
    %v392 = vpop.f32.mrb[0].mxu0
    %v393 = vadd.f32 %v318, %v392
    %394 = vdwg.mxu0
    %v395 = vtanh.pop %v391
    %v396 = vtanh.pop %v393
    %v397 = vmul.f32 %v395, 0.5
    %v398 = vmul.f32 %v396, 0.5
    %v399 = vadd.f32 %v397, 0.5
    %v400 = vadd.f32 %v398, 0.5
    %v401 = vmul.f32 %v399, %v310
    %403 = vrot.lane.b32.xlu0 %v396, 64
    %v404 = vpop.permute.xlu0 %403
    %v406 = vmul.f32 %v399, %v404
    %408 = vrot.lane.b32.xlu0 %v406, 64
    %v409 = vpop.permute.xlu0 %408
    %v411 = vadd.f32 %v401, %v409
    %v412 = vtanh.pop %v411
    %414 = vrot.lane.b32.xlu0 %v412, 64
    %v415 = vpop.permute.xlu0 %414
    %v417 = vmul.f32 %v400, %v415
    %v418 = vrot.slane %v166, 6
    %v419 = vrot.slane %v168, 6
    %v423 = vsel %vm219, %v417, 0
    %425 = vmatprep.subr.mxu0 %v61
    %426 = vmatpush1.msra.mxu0 %v60
    %427 = vmatprep.subr.mxu0 %v63
    %428 = vmatpush1.msra.mxu0 %v62
    %429 = vmatprep.subr.mxu0 %v65
    %430 = vmatpush1.msra.mxu0 %v64
    %431 = vmatprep.subr.mxu0 %v67
    %432 = vmatpush1.msra.mxu0 %v66
    %433 = vmatprep.subr.mxu0 %v69
    %434 = vmatpush1.msra.mxu0 %v68
    %435 = vmatprep.subr.mxu0 %v71
    %436 = vmatpush1.msra.mxu0 %v70
    %437 = vmatprep.subr.mxu0 %v73
    %438 = vmatpush1.msra.mxu0 %v72
    %439 = vmatprep.subr.mxu0 %v75
    %440 = vmatpush1.msra.mxu0 %v74
    %441 = vmatprep.subr.mxu0 0.0
    %442 = vmatpush1.msra.mxu0 0.0
    %443 = vmatprep.subr.mxu0 0.0
    %444 = vmatpush1.msra.mxu0 0.0
    %445 = vmatprep.subr.mxu0 0.0
    %446 = vmatpush1.msra.mxu0 0.0
    %447 = vmatprep.subr.mxu0 0.0
    %448 = vmatpush1.msra.mxu0 0.0
    %449 = vmatprep.subr.mxu0 0.0
    %450 = vmatpush1.msra.mxu0 0.0
    %451 = vmatprep.subr.mxu0 0.0
    %452 = vmatpush1.msra.mxu0 0.0
    %453 = vmatprep.subr.mxu0 0.0
    %454 = vmatpush1.msra.mxu0 0.0
    %455 = vmatprep.subr.mxu0 0.0
    %456 = vmatpush1.msra.mxu0 0.0
    %457 = vmatprep.subr.mxu0 0.0
    %458 = vmatpush1.msra.mxu0 0.0
    %459 = vmatprep.subr.mxu0 0.0
    %460 = vmatpush1.msra.mxu0 0.0
    %461 = vmatprep.subr.mxu0 0.0
    %462 = vmatpush1.msra.mxu0 0.0
    %463 = vmatprep.subr.mxu0 0.0
    %464 = vmatpush1.msra.mxu0 0.0
    %465 = vmatprep.subr.mxu0 0.0
    %466 = vmatpush1.msra.mxu0 0.0
    %467 = vmatprep.subr.mxu0 0.0
    %468 = vmatpush1.msra.mxu0 0.0
    %469 = vmatprep.subr.mxu0 0.0
    %470 = vmatpush1.msra.mxu0 0.0
    %471 = vmatprep.subr.mxu0 0.0
    %472 = vmatpush1.msra.mxu0 0.0
    %473 = vmatprep.subr.mxu0 0.0
    %474 = vmatpush1.msra.mxu0 0.0
    %475 = vmatprep.subr.mxu0 0.0
    %476 = vmatpush1.msra.mxu0 0.0
    %477 = vmatprep.subr.mxu0 0.0
    %478 = vmatpush1.msra.mxu0 0.0
    %479 = vmatprep.subr.mxu0 0.0
    %480 = vmatpush1.msra.mxu0 0.0
    %481 = vmatprep.subr.mxu0 0.0
    %482 = vmatpush1.msra.mxu0 0.0
    %483 = vmatprep.subr.mxu0 0.0
    %484 = vmatpush1.msra.mxu0 0.0
    %485 = vmatprep.subr.mxu0 0.0
    %486 = vmatpush1.msra.mxu0 0.0
    %487 = vmatprep.subr.mxu0 0.0
    %488 = vmatpush1.msra.mxu0 0.0
    %489 = vmatprep.mubr.f32.mxu0 0.0
    %490 = vmatmul.mubr.f32.gmra.mrb[0].mxu0 %v423
    %v491 = vpop.f32.mrb[0].mxu0
    %v492 = vadd.f32 %v418, %v491
    %v493 = vpop.f32.mrb[0].mxu0
    %v494 = vadd.f32 %v419, %v493
    %495 = vdwg.mxu0
    %v496 = vtanh.pop %v492
    %v497 = vtanh.pop %v494
    %v498 = vmul.f32 %v496, 0.5
    %v499 = vmul.f32 %v497, 0.5
    %v500 = vadd.f32 %v498, 0.5
    %v501 = vadd.f32 %v499, 0.5
    %v502 = vmul.f32 %v500, %v411
    %504 = vrot.lane.b32.xlu0 %v497, 64
    %v505 = vpop.permute.xlu0 %504
    %v507 = vmul.f32 %v500, %v505
    %509 = vrot.lane.b32.xlu0 %v507, 64
    %v510 = vpop.permute.xlu0 %509
    %v512 = vadd.f32 %v502, %v510
    %v513 = vtanh.pop %v512
    %515 = vrot.lane.b32.xlu0 %v513, 64
    %v516 = vpop.permute.xlu0 %515
    %v518 = vmul.f32 %v501, %v516
    %v520 = vsel %vm219, %v518, 0
    %522 = vmatprep.subr.mxu0 %v61
    %523 = vmatpush1.msra.mxu0 %v60
    %524 = vmatprep.subr.mxu0 %v63
    %525 = vmatpush1.msra.mxu0 %v62
    %526 = vmatprep.subr.mxu0 %v65
    %527 = vmatpush1.msra.mxu0 %v64
    %528 = vmatprep.subr.mxu0 %v67
    %529 = vmatpush1.msra.mxu0 %v66
    %530 = vmatprep.subr.mxu0 %v69
    %531 = vmatpush1.msra.mxu0 %v68
    %532 = vmatprep.subr.mxu0 %v71
    %533 = vmatpush1.msra.mxu0 %v70
    %534 = vmatprep.subr.mxu0 %v73
    %535 = vmatpush1.msra.mxu0 %v72
    %536 = vmatprep.subr.mxu0 %v75
    %537 = vmatpush1.msra.mxu0 %v74
    %538 = vmatprep.subr.mxu0 0.0
    %539 = vmatpush1.msra.mxu0 0.0
    %540 = vmatprep.subr.mxu0 0.0
    %541 = vmatpush1.msra.mxu0 0.0
    %542 = vmatprep.subr.mxu0 0.0
    %543 = vmatpush1.msra.mxu0 0.0
    %544 = vmatprep.subr.mxu0 0.0
    %545 = vmatpush1.msra.mxu0 0.0
    %546 = vmatprep.subr.mxu0 0.0
    %547 = vmatpush1.msra.mxu0 0.0
    %548 = vmatprep.subr.mxu0 0.0
    %549 = vmatpush1.msra.mxu0 0.0
    %550 = vmatprep.subr.mxu0 0.0
    %551 = vmatpush1.msra.mxu0 0.0
    %552 = vmatprep.subr.mxu0 0.0
    %553 = vmatpush1.msra.mxu0 0.0
    %554 = vmatprep.subr.mxu0 0.0
    %555 = vmatpush1.msra.mxu0 0.0
    %556 = vmatprep.subr.mxu0 0.0
    %557 = vmatpush1.msra.mxu0 0.0
    %558 = vmatprep.subr.mxu0 0.0
    %559 = vmatpush1.msra.mxu0 0.0
    %560 = vmatprep.subr.mxu0 0.0
    %561 = vmatpush1.msra.mxu0 0.0
    %562 = vmatprep.subr.mxu0 0.0
    %563 = vmatpush1.msra.mxu0 0.0
    %564 = vmatprep.subr.mxu0 0.0
    %565 = vmatpush1.msra.mxu0 0.0
    %566 = vmatprep.subr.mxu0 0.0
    %567 = vmatpush1.msra.mxu0 0.0
    %568 = vmatprep.subr.mxu0 0.0
    %569 = vmatpush1.msra.mxu0 0.0
    %570 = vmatprep.subr.mxu0 0.0
    %571 = vmatpush1.msra.mxu0 0.0
    %572 = vmatprep.subr.mxu0 0.0
    %573 = vmatpush1.msra.mxu0 0.0
    %574 = vmatprep.subr.mxu0 0.0
    %575 = vmatpush1.msra.mxu0 0.0
    %576 = vmatprep.subr.mxu0 0.0
    %577 = vmatpush1.msra.mxu0 0.0
    %578 = vmatprep.subr.mxu0 0.0
    %579 = vmatpush1.msra.mxu0 0.0
    %580 = vmatprep.subr.mxu0 0.0
    %581 = vmatpush1.msra.mxu0 0.0
    %582 = vmatprep.subr.mxu0 0.0
    %583 = vmatpush1.msra.mxu0 0.0
    %584 = vmatprep.subr.mxu0 0.0
    %585 = vmatpush1.msra.mxu0 0.0
    %586 = vmatprep.mubr.f32.mxu0 0.0
    %587 = vmatmul.mubr.f32.gmra.mrb[0].mxu0 %v520
    %v588 = vpop.f32.mrb[0].mxu0
    %v589 = vadd.f32 %v172, %v588
    %v590 = vpop.f32.mrb[0].mxu0
    %v591 = vadd.f32 %v174, %v590
    %592 = vdwg.mxu0
    %v593 = vtanh.pop %v589
    %v594 = vtanh.pop %v591
    %v595 = vmul.f32 %v593, 0.5
    %v596 = vmul.f32 %v594, 0.5
    %v597 = vadd.f32 %v595, 0.5
    %v598 = vadd.f32 %v596, 0.5
    %v599 = vmul.f32 %v597, %v512
    %601 = vrot.lane.b32.xlu0 %v594, 64
    %v602 = vpop.permute.xlu0 %601
    %v604 = vmul.f32 %v597, %v602
    %606 = vrot.lane.b32.xlu0 %v604, 64
    %v607 = vpop.permute.xlu0 %606
    %v609 = vadd.f32 %v599, %v607
    %v610 = vtanh.pop %v609
    %612 = vrot.lane.b32.xlu0 %v610, 64
    %v613 = vpop.permute.xlu0 %612
    %v615 = vmul.f32 %v598, %v613
    %v618 = vrot.slane %v172, 2
    %v619 = vrot.slane %v174, 2
    %v623 = vsel %vm219, %v615, 0
    %625 = vmatprep.subr.mxu0 %v61
    %626 = vmatpush1.msra.mxu0 %v60
    %627 = vmatprep.subr.mxu0 %v63
    %628 = vmatpush1.msra.mxu0 %v62
    %629 = vmatprep.subr.mxu0 %v65
    %630 = vmatpush1.msra.mxu0 %v64
    %631 = vmatprep.subr.mxu0 %v67
    %632 = vmatpush1.msra.mxu0 %v66
    %633 = vmatprep.subr.mxu0 %v69
    %634 = vmatpush1.msra.mxu0 %v68
    %635 = vmatprep.subr.mxu0 %v71
    %636 = vmatpush1.msra.mxu0 %v70
    %637 = vmatprep.subr.mxu0 %v73
    %638 = vmatpush1.msra.mxu0 %v72
    %639 = vmatprep.subr.mxu0 %v75
    %640 = vmatpush1.msra.mxu0 %v74
    %641 = vmatprep.subr.mxu0 0.0
    %642 = vmatpush1.msra.mxu0 0.0
    %643 = vmatprep.subr.mxu0 0.0
    %644 = vmatpush1.msra.mxu0 0.0
    %645 = vmatprep.subr.mxu0 0.0
    %646 = vmatpush1.msra.mxu0 0.0
    %647 = vmatprep.subr.mxu0 0.0
    %648 = vmatpush1.msra.mxu0 0.0
    %649 = vmatprep.subr.mxu0 0.0
    %650 = vmatpush1.msra.mxu0 0.0
    %651 = vmatprep.subr.mxu0 0.0
    %652 = vmatpush1.msra.mxu0 0.0
    %653 = vmatprep.subr.mxu0 0.0
    %654 = vmatpush1.msra.mxu0 0.0
    %655 = vmatprep.subr.mxu0 0.0
    %656 = vmatpush1.msra.mxu0 0.0
    %657 = vmatprep.subr.mxu0 0.0
    %658 = vmatpush1.msra.mxu0 0.0
    %659 = vmatprep.subr.mxu0 0.0
    %660 = vmatpush1.msra.mxu0 0.0
    %661 = vmatprep.subr.mxu0 0.0
    %662 = vmatpush1.msra.mxu0 0.0
    %663 = vmatprep.subr.mxu0 0.0
    %664 = vmatpush1.msra.mxu0 0.0
    %665 = vmatprep.subr.mxu0 0.0
    %666 = vmatpush1.msra.mxu0 0.0
    %667 = vmatprep.subr.mxu0 0.0
    %668 = vmatpush1.msra.mxu0 0.0
    %669 = vmatprep.subr.mxu0 0.0
    %670 = vmatpush1.msra.mxu0 0.0
    %671 = vmatprep.subr.mxu0 0.0
    %672 = vmatpush1.msra.mxu0 0.0
    %673 = vmatprep.subr.mxu0 0.0
    %674 = vmatpush1.msra.mxu0 0.0
    %675 = vmatprep.subr.mxu0 0.0
    %676 = vmatpush1.msra.mxu0 0.0
    %677 = vmatprep.subr.mxu0 0.0
    %678 = vmatpush1.msra.mxu0 0.0
    %679 = vmatprep.subr.mxu0 0.0
    %680 = vmatpush1.msra.mxu0 0.0
    %681 = vmatprep.subr.mxu0 0.0
    %682 = vmatpush1.msra.mxu0 0.0
    %683 = vmatprep.subr.mxu0 0.0
    %684 = vmatpush1.msra.mxu0 0.0
    %685 = vmatprep.subr.mxu0 0.0
    %686 = vmatpush1.msra.mxu0 0.0
    %687 = vmatprep.subr.mxu0 0.0
    %688 = vmatpush1.msra.mxu0 0.0
    %689 = vmatprep.mubr.f32.mxu0 0.0
    %690 = vmatmul.mubr.f32.gmra.mrb[0].mxu0 %v623
    %v691 = vpop.f32.mrb[0].mxu0
    %v692 = vadd.f32 %v618, %v691
    %v693 = vpop.f32.mrb[0].mxu0
    %v694 = vadd.f32 %v619, %v693
    %695 = vdwg.mxu0
    %v696 = vtanh.pop %v692
    %v697 = vtanh.pop %v694
    %v698 = vmul.f32 %v696, 0.5
    %v699 = vmul.f32 %v697, 0.5
    %v700 = vadd.f32 %v698, 0.5
    %v701 = vadd.f32 %v699, 0.5
    %v702 = vmul.f32 %v700, %v609
    %704 = vrot.lane.b32.xlu0 %v697, 64
    %v705 = vpop.permute.xlu0 %704
    %v707 = vmul.f32 %v700, %v705
    %709 = vrot.lane.b32.xlu0 %v707, 64
    %v710 = vpop.permute.xlu0 %709
    %v712 = vadd.f32 %v702, %v710
    %v713 = vtanh.pop %v712
    %715 = vrot.lane.b32.xlu0 %v713, 64
    %v716 = vpop.permute.xlu0 %715
    %v718 = vmul.f32 %v701, %v716
    %v719 = vrot.slane %v172, 4
    %v720 = vrot.slane %v174, 4
    %v724 = vsel %vm219, %v718, 0
    %726 = vmatprep.subr.mxu0 %v61
    %727 = vmatpush1.msra.mxu0 %v60
    %728 = vmatprep.subr.mxu0 %v63
    %729 = vmatpush1.msra.mxu0 %v62
    %730 = vmatprep.subr.mxu0 %v65
    %731 = vmatpush1.msra.mxu0 %v64
    %732 = vmatprep.subr.mxu0 %v67
    %733 = vmatpush1.msra.mxu0 %v66
    %734 = vmatprep.subr.mxu0 %v69
    %735 = vmatpush1.msra.mxu0 %v68
    %736 = vmatprep.subr.mxu0 %v71
    %737 = vmatpush1.msra.mxu0 %v70
    %738 = vmatprep.subr.mxu0 %v73
    %739 = vmatpush1.msra.mxu0 %v72
    %740 = vmatprep.subr.mxu0 %v75
    %741 = vmatpush1.msra.mxu0 %v74
    %742 = vmatprep.subr.mxu0 0.0
    %743 = vmatpush1.msra.mxu0 0.0
    %744 = vmatprep.subr.mxu0 0.0
    %745 = vmatpush1.msra.mxu0 0.0
    %746 = vmatprep.subr.mxu0 0.0
    %747 = vmatpush1.msra.mxu0 0.0
    %748 = vmatprep.subr.mxu0 0.0
    %749 = vmatpush1.msra.mxu0 0.0
    %750 = vmatprep.subr.mxu0 0.0
    %751 = vmatpush1.msra.mxu0 0.0
    %752 = vmatprep.subr.mxu0 0.0
    %753 = vmatpush1.msra.mxu0 0.0
    %754 = vmatprep.subr.mxu0 0.0
    %755 = vmatpush1.msra.mxu0 0.0
    %756 = vmatprep.subr.mxu0 0.0
    %757 = vmatpush1.msra.mxu0 0.0
    %758 = vmatprep.subr.mxu0 0.0
    %759 = vmatpush1.msra.mxu0 0.0
    %760 = vmatprep.subr.mxu0 0.0
    %761 = vmatpush1.msra.mxu0 0.0
    %762 = vmatprep.subr.mxu0 0.0
    %763 = vmatpush1.msra.mxu0 0.0
    %764 = vmatprep.subr.mxu0 0.0
    %765 = vmatpush1.msra.mxu0 0.0
    %766 = vmatprep.subr.mxu0 0.0
    %767 = vmatpush1.msra.mxu0 0.0
    %768 = vmatprep.subr.mxu0 0.0
    %769 = vmatpush1.msra.mxu0 0.0
    %770 = vmatprep.subr.mxu0 0.0
    %771 = vmatpush1.msra.mxu0 0.0
    %772 = vmatprep.subr.mxu0 0.0
    %773 = vmatpush1.msra.mxu0 0.0
    %774 = vmatprep.subr.mxu0 0.0
    %775 = vmatpush1.msra.mxu0 0.0
    %776 = vmatprep.subr.mxu0 0.0
    %777 = vmatpush1.msra.mxu0 0.0
    %778 = vmatprep.subr.mxu0 0.0
    %779 = vmatpush1.msra.mxu0 0.0
    %780 = vmatprep.subr.mxu0 0.0
    %781 = vmatpush1.msra.mxu0 0.0
    %782 = vmatprep.subr.mxu0 0.0
    %783 = vmatpush1.msra.mxu0 0.0
    %784 = vmatprep.subr.mxu0 0.0
    %785 = vmatpush1.msra.mxu0 0.0
    %786 = vmatprep.subr.mxu0 0.0
    %787 = vmatpush1.msra.mxu0 0.0
    %788 = vmatprep.subr.mxu0 0.0
    %789 = vmatpush1.msra.mxu0 0.0
    %790 = vmatprep.mubr.f32.mxu0 0.0
    %791 = vmatmul.mubr.f32.gmra.mrb[0].mxu0 %v724
    %v792 = vpop.f32.mrb[0].mxu0
    %v793 = vadd.f32 %v719, %v792
    %v794 = vpop.f32.mrb[0].mxu0
    %v795 = vadd.f32 %v720, %v794
    %796 = vdwg.mxu0
    %v797 = vtanh.pop %v793
    %v798 = vtanh.pop %v795
    %v799 = vmul.f32 %v797, 0.5
    %v800 = vmul.f32 %v798, 0.5
    %v801 = vadd.f32 %v799, 0.5
    %v802 = vadd.f32 %v800, 0.5
    %v803 = vmul.f32 %v801, %v712
    %805 = vrot.lane.b32.xlu0 %v798, 64
    %v806 = vpop.permute.xlu0 %805
    %v808 = vmul.f32 %v801, %v806
    %810 = vrot.lane.b32.xlu0 %v808, 64
    %v811 = vpop.permute.xlu0 %810
    %v813 = vadd.f32 %v803, %v811
    %v814 = vtanh.pop %v813
    %816 = vrot.lane.b32.xlu0 %v814, 64
    %v817 = vpop.permute.xlu0 %816
    %v819 = vmul.f32 %v802, %v817
    %v820 = vrot.slane %v172, 6
    %v821 = vrot.slane %v174, 6
    %v825 = vsel %vm219, %v819, 0
    %827 = vmatprep.subr.mxu0 %v61
    %828 = vmatpush1.msra.mxu0 %v60
    %829 = vmatprep.subr.mxu0 %v63
    %830 = vmatpush1.msra.mxu0 %v62
    %831 = vmatprep.subr.mxu0 %v65
    %832 = vmatpush1.msra.mxu0 %v64
    %833 = vmatprep.subr.mxu0 %v67
    %834 = vmatpush1.msra.mxu0 %v66
    %835 = vmatprep.subr.mxu0 %v69
    %836 = vmatpush1.msra.mxu0 %v68
    %837 = vmatprep.subr.mxu0 %v71
    %838 = vmatpush1.msra.mxu0 %v70
    %839 = vmatprep.subr.mxu0 %v73
    %840 = vmatpush1.msra.mxu0 %v72
    %841 = vmatprep.subr.mxu0 %v75
    %842 = vmatpush1.msra.mxu0 %v74
    %843 = vmatprep.subr.mxu0 0.0
    %844 = vmatpush1.msra.mxu0 0.0
    %845 = vmatprep.subr.mxu0 0.0
    %846 = vmatpush1.msra.mxu0 0.0
    %847 = vmatprep.subr.mxu0 0.0
    %848 = vmatpush1.msra.mxu0 0.0
    %849 = vmatprep.subr.mxu0 0.0
    %850 = vmatpush1.msra.mxu0 0.0
    %851 = vmatprep.subr.mxu0 0.0
    %852 = vmatpush1.msra.mxu0 0.0
    %853 = vmatprep.subr.mxu0 0.0
    %854 = vmatpush1.msra.mxu0 0.0
    %855 = vmatprep.subr.mxu0 0.0
    %856 = vmatpush1.msra.mxu0 0.0
    %857 = vmatprep.subr.mxu0 0.0
    %858 = vmatpush1.msra.mxu0 0.0
    %859 = vmatprep.subr.mxu0 0.0
    %860 = vmatpush1.msra.mxu0 0.0
    %861 = vmatprep.subr.mxu0 0.0
    %862 = vmatpush1.msra.mxu0 0.0
    %863 = vmatprep.subr.mxu0 0.0
    %864 = vmatpush1.msra.mxu0 0.0
    %865 = vmatprep.subr.mxu0 0.0
    %866 = vmatpush1.msra.mxu0 0.0
    %867 = vmatprep.subr.mxu0 0.0
    %868 = vmatpush1.msra.mxu0 0.0
    %869 = vmatprep.subr.mxu0 0.0
    %870 = vmatpush1.msra.mxu0 0.0
    %871 = vmatprep.subr.mxu0 0.0
    %872 = vmatpush1.msra.mxu0 0.0
    %873 = vmatprep.subr.mxu0 0.0
    %874 = vmatpush1.msra.mxu0 0.0
    %875 = vmatprep.subr.mxu0 0.0
    %876 = vmatpush1.msra.mxu0 0.0
    %877 = vmatprep.subr.mxu0 0.0
    %878 = vmatpush1.msra.mxu0 0.0
    %879 = vmatprep.subr.mxu0 0.0
    %880 = vmatpush1.msra.mxu0 0.0
    %881 = vmatprep.subr.mxu0 0.0
    %882 = vmatpush1.msra.mxu0 0.0
    %883 = vmatprep.subr.mxu0 0.0
    %884 = vmatpush1.msra.mxu0 0.0
    %885 = vmatprep.subr.mxu0 0.0
    %886 = vmatpush1.msra.mxu0 0.0
    %887 = vmatprep.subr.mxu0 0.0
    %888 = vmatpush1.msra.mxu0 0.0
    %889 = vmatprep.subr.mxu0 0.0
    %890 = vmatpush1.msra.mxu0 0.0
    %891 = vmatprep.mubr.f32.mxu0 0.0
    %892 = vmatmul.mubr.f32.gmra.mrb[0].mxu0 %v825
    %v893 = vpop.f32.mrb[0].mxu0
    %v894 = vadd.f32 %v820, %v893
    %v895 = vpop.f32.mrb[0].mxu0
    %v896 = vadd.f32 %v821, %v895
    %897 = vdwg.mxu0
    %v898 = vtanh.pop %v894
    %v899 = vtanh.pop %v896
    %v900 = vmul.f32 %v898, 0.5
    %v901 = vmul.f32 %v899, 0.5
    %v902 = vadd.f32 %v900, 0.5
    %v903 = vadd.f32 %v901, 0.5
    %v904 = vmul.f32 %v902, %v813
    %906 = vrot.lane.b32.xlu0 %v899, 64
    %v907 = vpop.permute.xlu0 %906
    %v909 = vmul.f32 %v902, %v907
    %911 = vrot.lane.b32.xlu0 %v909, 64
    %v912 = vpop.permute.xlu0 %911
    %v914 = vadd.f32 %v904, %v912
    %v915 = vtanh.pop %v914
    %917 = vrot.lane.b32.xlu0 %v915, 64
    %v918 = vpop.permute.xlu0 %917
    %v920 = vmul.f32 %v903, %v918
    %v922 = vsel %vm219, %v920, 0
    %924 = vmatprep.subr.mxu0 %v61
    %925 = vmatpush1.msra.mxu0 %v60
    %926 = vmatprep.subr.mxu0 %v63
    %927 = vmatpush1.msra.mxu0 %v62
    %928 = vmatprep.subr.mxu0 %v65
    %929 = vmatpush1.msra.mxu0 %v64
    %930 = vmatprep.subr.mxu0 %v67
    %931 = vmatpush1.msra.mxu0 %v66
    %932 = vmatprep.subr.mxu0 %v69
    %933 = vmatpush1.msra.mxu0 %v68
    %934 = vmatprep.subr.mxu0 %v71
    %935 = vmatpush1.msra.mxu0 %v70
    %936 = vmatprep.subr.mxu0 %v73
    %937 = vmatpush1.msra.mxu0 %v72
    %938 = vmatprep.subr.mxu0 %v75
    %939 = vmatpush1.msra.mxu0 %v74
    %940 = vmatprep.subr.mxu0 0.0
    %941 = vmatpush1.msra.mxu0 0.0
    %942 = vmatprep.subr.mxu0 0.0
    %943 = vmatpush1.msra.mxu0 0.0
    %944 = vmatprep.subr.mxu0 0.0
    %945 = vmatpush1.msra.mxu0 0.0
    %946 = vmatprep.subr.mxu0 0.0
    %947 = vmatpush1.msra.mxu0 0.0
    %948 = vmatprep.subr.mxu0 0.0
    %949 = vmatpush1.msra.mxu0 0.0
    %950 = vmatprep.subr.mxu0 0.0
    %951 = vmatpush1.msra.mxu0 0.0
    %952 = vmatprep.subr.mxu0 0.0
    %953 = vmatpush1.msra.mxu0 0.0
    %954 = vmatprep.subr.mxu0 0.0
    %955 = vmatpush1.msra.mxu0 0.0
    %956 = vmatprep.subr.mxu0 0.0
    %957 = vmatpush1.msra.mxu0 0.0
    %958 = vmatprep.subr.mxu0 0.0
    %959 = vmatpush1.msra.mxu0 0.0
    %960 = vmatprep.subr.mxu0 0.0
    %961 = vmatpush1.msra.mxu0 0.0
    %962 = vmatprep.subr.mxu0 0.0
    %963 = vmatpush1.msra.mxu0 0.0
    %964 = vmatprep.subr.mxu0 0.0
    %965 = vmatpush1.msra.mxu0 0.0
    %966 = vmatprep.subr.mxu0 0.0
    %967 = vmatpush1.msra.mxu0 0.0
    %968 = vmatprep.subr.mxu0 0.0
    %969 = vmatpush1.msra.mxu0 0.0
    %970 = vmatprep.subr.mxu0 0.0
    %971 = vmatpush1.msra.mxu0 0.0
    %972 = vmatprep.subr.mxu0 0.0
    %973 = vmatpush1.msra.mxu0 0.0
    %974 = vmatprep.subr.mxu0 0.0
    %975 = vmatpush1.msra.mxu0 0.0
    %976 = vmatprep.subr.mxu0 0.0
    %977 = vmatpush1.msra.mxu0 0.0
    %978 = vmatprep.subr.mxu0 0.0
    %979 = vmatpush1.msra.mxu0 0.0
    %980 = vmatprep.subr.mxu0 0.0
    %981 = vmatpush1.msra.mxu0 0.0
    %982 = vmatprep.subr.mxu0 0.0
    %983 = vmatpush1.msra.mxu0 0.0
    %984 = vmatprep.subr.mxu0 0.0
    %985 = vmatpush1.msra.mxu0 0.0
    %986 = vmatprep.subr.mxu0 0.0
    %987 = vmatpush1.msra.mxu0 0.0
    %988 = vmatprep.mubr.f32.mxu0 0.0
    %989 = vmatmul.mubr.f32.gmra.mrb[0].mxu0 %v922
    %v990 = vpop.f32.mrb[0].mxu0
    %v991 = vadd.f32 %v85, %v990
    %v992 = vpop.f32.mrb[0].mxu0
    %v993 = vadd.f32 %v89, %v992
    %994 = vdwg.mxu0
    %v995 = vtanh.pop %v991
    %v996 = vtanh.pop %v993
    %v997 = vmul.f32 %v995, 0.5
    %v998 = vmul.f32 %v996, 0.5
    %v999 = vadd.f32 %v997, 0.5
    %v1000 = vadd.f32 %v998, 0.5
    %v1001 = vmul.f32 %v999, %v914
    %1003 = vrot.lane.b32.xlu0 %v996, 64
    %v1004 = vpop.permute.xlu0 %1003
    %v1006 = vmul.f32 %v999, %v1004
    %1008 = vrot.lane.b32.xlu0 %v1006, 64
    %v1009 = vpop.permute.xlu0 %1008
    %v1011 = vadd.f32 %v1001, %v1009
    %v1012 = vtanh.pop %v1011
    %1014 = vrot.lane.b32.xlu0 %v1012, 64
    %v1015 = vpop.permute.xlu0 %1014
    %v1017 = vmul.f32 %v1000, %v1015
    %v1018 = vld [vmem:[%s5] sm:$0xff]
    %v1019 = vld [vmem:[%s5 + $0x8] sm:$0xff]
    %v1020 = vld [vmem:[%s5 + $0x10] sm:$0xff]
    %v1021 = vld [vmem:[%s5 + $0x18] sm:$0xff]
    %v1022 = vld [vmem:[%s6] sm:$0x1]
    %v1024 = vlaneseq
    %v1025 = vshrl.u32 %v1024, 7
    %v1026 = vsub.s32 0, %v1025
    %v1027 = vrot.slane %v1022, %v1026
    %1030 = vrot.lane.b32.xlu0 %v1017, 96
    %v1031 = vpop.permute.xlu0 %1030
    %vm1032 = vcmask 261120
    %v1033 = vsel %vm1032, %v1031, 0
    %1035 = vmatprep.subr.mxu0 0.0
    %1036 = vmatpush1.msra.mxu0 %v1018
    %1037 = vmatprep.subr.mxu0 0.0
    %1038 = vmatpush1.msra.mxu0 %v1019
    %1039 = vmatprep.subr.mxu0 0.0
    %1040 = vmatpush1.msra.mxu0 %v1020
    %1041 = vmatprep.subr.mxu0 0.0
    %1042 = vmatpush1.msra.mxu0 %v1021
    %1043 = vmatprep.subr.mxu0 0.0
    %1044 = vmatpush1.msra.mxu0 0.0
    %1045 = vmatprep.subr.mxu0 0.0
    %1046 = vmatpush1.msra.mxu0 0.0
    %1047 = vmatprep.subr.mxu0 0.0
    %1048 = vmatpush1.msra.mxu0 0.0
    %1049 = vmatprep.subr.mxu0 0.0
    %1050 = vmatpush1.msra.mxu0 0.0
    %1051 = vmatprep.subr.mxu0 0.0
    %1052 = vmatpush1.msra.mxu0 0.0
    %1053 = vmatprep.subr.mxu0 0.0
    %1054 = vmatpush1.msra.mxu0 0.0
    %1055 = vmatprep.subr.mxu0 0.0
    %1056 = vmatpush1.msra.mxu0 0.0
    %1057 = vmatprep.subr.mxu0 0.0
    %1058 = vmatpush1.msra.mxu0 0.0
    %1059 = vmatprep.subr.mxu0 0.0
    %1060 = vmatpush1.msra.mxu0 0.0
    %1061 = vmatprep.subr.mxu0 0.0
    %1062 = vmatpush1.msra.mxu0 0.0
    %1063 = vmatprep.subr.mxu0 0.0
    %1064 = vmatpush1.msra.mxu0 0.0
    %1065 = vmatprep.subr.mxu0 0.0
    %1066 = vmatpush1.msra.mxu0 0.0
    %1067 = vmatprep.subr.mxu0 0.0
    %1068 = vmatpush1.msra.mxu0 0.0
    %1069 = vmatprep.subr.mxu0 0.0
    %1070 = vmatpush1.msra.mxu0 0.0
    %1071 = vmatprep.subr.mxu0 0.0
    %1072 = vmatpush1.msra.mxu0 0.0
    %1073 = vmatprep.subr.mxu0 0.0
    %1074 = vmatpush1.msra.mxu0 0.0
    %1075 = vmatprep.subr.mxu0 0.0
    %1076 = vmatpush1.msra.mxu0 0.0
    %1077 = vmatprep.subr.mxu0 0.0
    %1078 = vmatpush1.msra.mxu0 0.0
    %1079 = vmatprep.subr.mxu0 0.0
    %1080 = vmatpush1.msra.mxu0 0.0
    %1081 = vmatprep.subr.mxu0 0.0
    %1082 = vmatpush1.msra.mxu0 0.0
    %1083 = vmatprep.subr.mxu0 0.0
    %1084 = vmatpush1.msra.mxu0 0.0
    %1085 = vmatprep.subr.mxu0 0.0
    %1086 = vmatpush1.msra.mxu0 0.0
    %1087 = vmatprep.subr.mxu0 0.0
    %1088 = vmatpush1.msra.mxu0 0.0
    %1089 = vmatprep.subr.mxu0 0.0
    %1090 = vmatpush1.msra.mxu0 0.0
    %1091 = vmatprep.subr.mxu0 0.0
    %1092 = vmatpush1.msra.mxu0 0.0
    %1093 = vmatprep.subr.mxu0 0.0
    %1094 = vmatpush1.msra.mxu0 0.0
    %1095 = vmatprep.subr.mxu0 0.0
    %1096 = vmatpush1.msra.mxu0 0.0
    %1097 = vmatprep.subr.mxu0 0.0
    %1098 = vmatpush1.msra.mxu0 0.0
    %1099 = vmatprep.mubr.f32.mxu0 0.0
    %1100 = vmatmul.mubr.f32.gmra.mrb[0].mxu0 %v1033
    %v1101 = vpop.f32.mrb[0].mxu0
    %v1102 = vadd.f32 %v1027, %v1101
    %v1103 = vpop.f32.mrb[0].mxu0
    %1104 = vdwg.mxu0
    %vm1105 = vcmp.gt.f32.partialorder %v1102, 0.0
    %v1106 = vmul.f32 %v1102, 0.01
    %v1107 = vsel %vm1105, %v1102, %v1106
    %v1108 = vld [vmem:[%s7] sm:$0x1]
    %v1110 = vlaneseq
    %v1111 = vshrl.u32 %v1110, 7
    %v1112 = vsub.s32 0, %v1111
    %v1113 = vrot.slane %v1108, %v1112
    %v1115 = vmul.f32 %v1107, %v1113
    %vm1116 = vcmask 254976
    %v1117 = vsel %vm1116, %v1115, 0.0
    %1118 = vadd.xlane.f32.xlu0 %v1117
    %v1119 = vpop.xlane.xlu0 %1118
    %v1120 = vld [vmem:[#allocation2] sm:$0x1]
    %v1122 = vlaneseq
    %v1123 = vshrl.u32 %v1122, 7
    %v1124 = vsub.s32 0, %v1123
    %v1125 = vrot.slane %v1120, %v1124
    %v1127 = vadd.f32 %v1119, %v1125
    %vm1128 = vcmask 1024
    %1129 = vst.msk [vmem:[%s9] sm:$0x3] %vm1128, %v1127
    // Predicated region
    $region46: #{tpu_custom_call.1} parent=1 // pred_check
      _
    $region47: #{tpu_custom_call.1} parent=1 // pred_check_branch
      %1131 = sbr.rel (0) target = $region49
    $region48: #{tpu_custom_call.1} parent=1 // pred_region
      _
    $region49: #{tpu_custom_call.1} parent=1 // pred_fallthru
      _
    // Predicated region
    $region50: #{tpu_custom_call.1} parent=1 // pred_check
      _
    $region51: #{tpu_custom_call.1} parent=1 // pred_check_branch
      %1133 = sbr.rel (0) target = $region53
    $region52: #{tpu_custom_call.1} parent=1 // pred_region
      _
    $region53: #{tpu_custom_call.1} parent=1 // pred_fallthru
      _
    %1134 = vsyncpa [#allocation4], 1
    %1135 = vsyncpa [#allocation6], 1

</llo_original>
